<compile_context>
chip_gen: v6e
topology: v6e:2x2x1
jax: 0.10.0
libtpu: 0.0.40
codegen_flags: <defaults>
</compile_context>

<pallas_src>
from functools import partial

import jax
import jax.numpy as jnp
from jax.experimental import pallas as pl
from jax.experimental.pallas import tpu as pltpu

_LANE = 128  # feature / hidden / head dims are all zero-padded to this lane width


# ----------------------------- fused Pallas kernel -----------------------------

def _fused_vgae_kernel(a_ref, x_ref, w_ref, b_ref, o_ref):
    """One grid step == one graph.

    out = A @ ( relu( (A @ X) @ W1 + b1 ) @ Wcat ) + bcat
    a/x/w refs are bf16, lane-padded to 128; matmuls accumulate in f32 on the MXU;
    bias + ReLU epilogue stays f32. Output is a lane-dense [N, 128] f32 slab.
    """
    a = a_ref[0]            # [N, N]     bf16
    x = x_ref[0]            # [N, 128]   bf16 (features zero-padded)
    w1 = w_ref[0]           # [128, 128] bf16 (F -> hidden, zero padded)
    wc = w_ref[1]           # [128, 128] bf16 ([w_mu | w_logstd], zero padded)
    b = b_ref[...]          # [2, 128]   f32
    b1 = b[0:1, :]
    bc = b[1:2, :]

    # ---- conv1, aggregation-first (F < hidden): (A @ X) @ W1 + b1, then ReLU ----
    ax = jnp.dot(a, x, preferred_element_type=jnp.float32)                   # [N,128] f32
    h = jnp.dot(ax.astype(jnp.bfloat16), w1,
                preferred_element_type=jnp.float32) + b1                     # [N,128] f32
    h = jnp.maximum(h, 0.0)

    # ---- conv_mu | conv_logstd fused, transform-first: A @ (H @ Wcat) + bcat ----
    hw = jnp.dot(h.astype(jnp.bfloat16), wc,
                 preferred_element_type=jnp.float32)                         # [N,128] f32
    out = jnp.dot(a, hw.astype(jnp.bfloat16),
                  preferred_element_type=jnp.float32) + bc                   # [N,128] f32

    o_ref[0] = out.astype(o_ref.dtype)


def _vgae_pallas_call(a_bf, x_bf, w_stack, b_stack):
    """Batched fused encoder: a_bf [B,N,N] bf16, x_bf [B,N,128] bf16 -> [B,N,128] f32."""
    B, N, _ = a_bf.shape

    flops = B * (2 * N * N * _LANE + 2 * N * _LANE * _LANE
                 + 2 * N * _LANE * _LANE + 2 * N * N * _LANE)
    bytes_accessed = (2 * B * (N * N + N * _LANE)      # bf16 a, x
                      + 2 * 2 * _LANE * _LANE          # bf16 weight slab
                      + 4 * 2 * _LANE                  # f32 bias slab
                      + 4 * B * N * _LANE)             # f32 output

    return pl.pallas_call(
        _fused_vgae_kernel,
        out_shape=jax.ShapeDtypeStruct((B, N, _LANE), jnp.float32),
        grid=(B,),
        in_specs=[
            pl.BlockSpec((1, N, N), lambda b: (b, 0, 0)),        # per-graph adjacency
            pl.BlockSpec((1, N, _LANE), lambda b: (b, 0, 0)),    # per-graph features
            pl.BlockSpec((2, _LANE, _LANE), lambda b: (0, 0, 0)),  # stacked weights (invariant)
            pl.BlockSpec((2, _LANE), lambda b: (0, 0)),            # stacked biases (invariant)
        ],
        out_specs=pl.BlockSpec((1, N, _LANE), lambda b: (b, 0, 0)),
        compiler_params=pltpu.CompilerParams(
            # graphs are independent: v7x splits them across its 2 TensorCores,
            # no-op on v5e/v6e (single TC).
            dimension_semantics=("parallel",),
        ),
        cost_estimate=pl.CostEstimate(flops=flops, transcendentals=0,
                                      bytes_accessed=bytes_accessed),
    )(a_bf, x_bf, w_stack, b_stack)


# ------------------------- hoisted (one-time) preparation -------------------------

def make_normalized_adj(edge_index, num_nodes):
    """Dense GCN normalization: A_hat = D^-1/2 (A + I) D^-1/2 (self-loops forced to 1)."""
    src, dst = edge_index[0], edge_index[1]
    a = jnp.zeros((num_nodes, num_nodes), dtype=jnp.float32)
    a = a.at[dst, src].set(1.0)                       # aggregate at target node (PyG)
    idx = jnp.arange(num_nodes)
    a = a.at[idx, idx].set(1.0)                       # self-loops (idempotent)
    deg = jnp.sum(a, axis=1)
    d_inv_sqrt = jnp.where(deg > 0, 1.0 / jnp.sqrt(deg), 0.0)
    return a * d_inv_sqrt[:, None] * d_inv_sqrt[None, :]


def precompute_adjacency_bf16(edge_index, num_nodes):
    """GCNConv(cached=True) analogue: build + normalize + bf16-cast A once, reuse."""
    return make_normalized_adj(edge_index, num_nodes).astype(jnp.bfloat16)


def pack_params(params):
    """Pad + stack the three GCN layers into two lane-dense slabs (done once).

    w_stack : [2, 128, 128] bf16  (slab 0 = W1 padded, slab 1 = [W_mu | W_logstd] padded)
    b_stack : [2, 128]      f32   (row 0 = b1 padded,  row 1 = [b_mu | b_logstd] padded)
    Zero padding keeps the math exact (padded h columns are relu(0 + 0) = 0).
    """
    f, hidden = params["w1"].shape
    out_c = params["w_mu"].shape[1]
    assert f <= _LANE and hidden <= _LANE and 2 * out_c <= _LANE, (
        "packing scheme assumes in_channels, hidden and 2*out_channels all fit in 128 lanes")
    # TODO(synk): if hidden / 2*out_channels ever exceed 128, split the head slab over a
    # lane grid axis and update the mu/logstd slicing in lockstep.

    w_stack = jnp.zeros((2, _LANE, _LANE), jnp.float32)
    w_stack = w_stack.at[0, :f, :hidden].set(params["w1"])
    w_stack = w_stack.at[1, :hidden, :out_c].set(params["w_mu"])
    w_stack = w_stack.at[1, :hidden, out_c:2 * out_c].set(params["w_ls"])

    b_stack = jnp.zeros((2, _LANE), jnp.float32)
    b_stack = b_stack.at[0, :hidden].set(params["b1"])
    b_stack = b_stack.at[1, :out_c].set(params["b_mu"])
    b_stack = b_stack.at[1, out_c:2 * out_c].set(params["b_ls"])

    return {
        "w_stack": w_stack.astype(jnp.bfloat16),
        "b_stack": b_stack,
        "out_channels": out_c,
    }


# --------------------------------- forward pass ---------------------------------

@partial(jax.jit, static_argnames=("out_channels",))
def _encode(a_bf, x, w_stack, b_stack, out_channels):
    """Batched forward: a_bf [B,N,N] bf16, x [B,N,F] f32 -> (mu, logstd) [B,N,C] f32."""
    B, N, f = x.shape
    x_bf = jnp.zeros((B, N, _LANE), jnp.bfloat16).at[..., :f].set(x.astype(jnp.bfloat16))
    out = _vgae_pallas_call(a_bf, x_bf, w_stack, b_stack)
    return out[..., :out_channels], out[..., out_channels:2 * out_channels]


def variational_gcn_encoder(packed, a_bf, x):
    """Single-graph forward(x, A_cached) -> (mu, logstd), matching the PyTorch module."""
    mu, ls = _encode(a_bf[None], x[None], packed["w_stack"], packed["b_stack"],
                     out_channels=packed["out_channels"])
    return mu[0], ls[0]


def variational_gcn_encoder_batched(packed, a_bf_batch, x_batch):
    """Multiple independent graphs per pallas_call (amortizes launch/DMA overhead)."""
    return _encode(a_bf_batch, x_batch, packed["w_stack"], packed["b_stack"],
                   out_channels=packed["out_channels"])


# ------------------------------- params / init -------------------------------

def glorot(key, shape):
    fan_in, fan_out = shape
    limit = jnp.sqrt(6.0 / (fan_in + fan_out))
    return jax.random.uniform(key, shape, dtype=jnp.float32, minval=-limit, maxval=limit)


def init_params(key, in_channels, out_channels):
    hidden = 2 * out_channels
    k1, k2, k3 = jax.random.split(key, 3)
    return {
        "w1": glorot(k1, (in_channels, hidden)),
        "b1": jnp.zeros((hidden,), jnp.float32),
        "w_mu": glorot(k2, (hidden, out_channels)),
        "b_mu": jnp.zeros((out_channels,), jnp.float32),
        "w_ls": glorot(k3, (hidden, out_channels)),
        "b_ls": jnp.zeros((out_channels,), jnp.float32),
    }


# --------------------------------- references ---------------------------------

def reference_forward_bf16(params, x, edge_index):
    """Pure-JAX reference mirroring the kernel's bf16-input / f32-accumulate math."""
    n, _ = x.shape
    a_bf = make_normalized_adj(edge_index, n).astype(jnp.bfloat16)
    x_bf = x.astype(jnp.bfloat16)
    w1_bf = params["w1"].astype(jnp.bfloat16)
    wmu_bf = params["w_mu"].astype(jnp.bfloat16)
    wls_bf = params["w_ls"].astype(jnp.bfloat16)

    ax = jnp.dot(a_bf, x_bf, preferred_element_type=jnp.float32)
    h = jnp.dot(ax.astype(jnp.bfloat16), w1_bf,
                preferred_element_type=jnp.float32) + params["b1"]
    h = jax.nn.relu(h)
    h_bf = h.astype(jnp.bfloat16)
    hmu = jnp.dot(h_bf, wmu_bf, preferred_element_type=jnp.float32)
    hls = jnp.dot(h_bf, wls_bf, preferred_element_type=jnp.float32)
    mu = jnp.dot(a_bf, hmu.astype(jnp.bfloat16),
                 preferred_element_type=jnp.float32) + params["b_mu"]
    ls = jnp.dot(a_bf, hls.astype(jnp.bfloat16),
                 preferred_element_type=jnp.float32) + params["b_ls"]
    return mu, ls


def reference_forward_f32(params, x, edge_index):
    n = x.shape[0]
    a = make_normalized_adj(edge_index, n)
    h = jax.nn.relu(a @ (x @ params["w1"]) + params["b1"])
    mu = a @ (h @ params["w_mu"]) + params["b_mu"]
    ls = a @ (h @ params["w_ls"]) + params["b_ls"]
    return mu, ls


# ----------------------------------- main -----------------------------------

if __name__ == "__main__":
    key = jax.random.PRNGKey(0)
    kx, kp, kb = jax.random.split(key, 3)

    # Small deterministic problem: N=16 nodes, in_channels=10 (PCA n_components=10),
    # out_channels=48 (as in the module), hidden = 2*48 = 96.
    num_nodes = 16
    in_channels = 10
    out_channels = 48

    x = jax.random.normal(kx, (num_nodes, in_channels), dtype=jnp.float32)

    # Undirected ring graph, both directions listed (PyG-style edge_index [2, E]).
    src = jnp.arange(num_nodes, dtype=jnp.int32)
    dst = (src + 1) % num_nodes
    edge_index = jnp.stack(
        [jnp.concatenate([src, dst]), jnp.concatenate([dst, src])], axis=0
    )

    params = init_params(kp, in_channels, out_channels)

    # One-time prep (hoisted out of the forward path).
    packed = pack_params(params)
    a_bf = precompute_adjacency_bf16(edge_index, num_nodes)

    # ---- single-graph forward (module semantics) ----
    mu, logstd = variational_gcn_encoder(packed, a_bf, x)
    jax.block_until_ready((mu, logstd))

    assert mu.shape == (num_nodes, out_channels)
    assert logstd.shape == (num_nodes, out_channels)
    assert mu.dtype == jnp.float32 and logstd.dtype == jnp.float32

    # Tight check against a reference using the exact same bf16/f32 cast sequence.
    mu_rb, ls_rb = reference_forward_bf16(params, x, edge_index)
    assert jnp.allclose(mu, mu_rb, atol=1e-2), float(jnp.max(jnp.abs(mu - mu_rb)))
    assert jnp.allclose(logstd, ls_rb, atol=1e-2), float(jnp.max(jnp.abs(logstd - ls_rb)))

    # Loose sanity check against full-f32 semantics of the PyTorch module.
    mu_rf, ls_rf = reference_forward_f32(params, x, edge_index)
    assert float(jnp.max(jnp.abs(mu - mu_rf))) < 0.1
    assert float(jnp.max(jnp.abs(logstd - ls_rf))) < 0.1

    # ---- batched forward: 4 graphs in one pallas_call (amortizes launch overhead) ----
    B = 4
    x_batch = jax.random.normal(kb, (B, num_nodes, in_channels), dtype=jnp.float32)
    a_batch = jnp.broadcast_to(a_bf, (B, num_nodes, num_nodes))
    mu_b, ls_b = variational_gcn_encoder_batched(packed, a_batch, x_batch)
    jax.block_until_ready((mu_b, ls_b))
    assert mu_b.shape == (B, num_nodes, out_channels)
    assert ls_b.shape == (B, num_nodes, out_channels)
    for b in range(B):
        mu_r, ls_r = reference_forward_bf16(params, x_batch[b], edge_index)
        assert jnp.allclose(mu_b[b], mu_r, atol=1e-2)
        assert jnp.allclose(ls_b[b], ls_r, atol=1e-2)

    print("KERNEL_OK")
</pallas_src>

<mosaic_0001>
module attributes {stable_mosaic.version = 11 : i64} {
  func.func @_fused_vgae_kernel(%arg0: i32, %arg1: memref<1x16x16xbf16, #tpu.memory_space<vmem>>, %arg2: memref<1x16x128xbf16, #tpu.memory_space<vmem>>, %arg3: memref<2x128x128xbf16, #tpu.memory_space<vmem>>, %arg4: memref<2x128xf32, #tpu.memory_space<vmem>>, %arg5: memref<1x16x128xf32, #tpu.memory_space<vmem>>) attributes {dimension_semantics = [#tpu.dimension_semantics<parallel>], iteration_bounds = array<i64: 1>, scalar_prefetch = 0 : i64, scratch_operands = 0 : i64, tpu.core_type = #tpu.core_type<tc>, window_params = [{transform_indices = @transform_0, window_bounds = array<i64: 1, 16, 16>}, {transform_indices = @transform_1, window_bounds = array<i64: 1, 16, 128>}, {pipeline_mode = #tpu.pipeline_mode<synchronous>, transform_indices = @transform_2, window_bounds = array<i64: 2, 128, 128>}, {pipeline_mode = #tpu.pipeline_mode<synchronous>, transform_indices = @transform_3, window_bounds = array<i64: 2, 128>}, {transform_indices = @transform_4, window_bounds = array<i64: 1, 16, 128>}]} {
    %c0 = arith.constant 0 : index
    %c0_0 = arith.constant 0 : index
    %c0_1 = arith.constant 0 : index
    %0 = vector.load %arg1[%c0, %c0_0, %c0_1] : memref<1x16x16xbf16, #tpu.memory_space<vmem>>, vector<1x16x16xbf16>
    %1 = vector.shape_cast %0 : vector<1x16x16xbf16> to vector<16x16xbf16>
    %c0_2 = arith.constant 0 : index
    %c0_3 = arith.constant 0 : index
    %c0_4 = arith.constant 0 : index
    %2 = vector.load %arg2[%c0_2, %c0_3, %c0_4] : memref<1x16x128xbf16, #tpu.memory_space<vmem>>, vector<1x16x128xbf16>
    %3 = vector.shape_cast %2 : vector<1x16x128xbf16> to vector<16x128xbf16>
    %c0_5 = arith.constant 0 : index
    %c0_6 = arith.constant 0 : index
    %c0_7 = arith.constant 0 : index
    %4 = vector.load %arg3[%c0_5, %c0_6, %c0_7] : memref<2x128x128xbf16, #tpu.memory_space<vmem>>, vector<1x128x128xbf16>
    %5 = vector.shape_cast %4 : vector<1x128x128xbf16> to vector<128x128xbf16>
    %c1 = arith.constant 1 : index
    %c0_8 = arith.constant 0 : index
    %c0_9 = arith.constant 0 : index
    %6 = vector.load %arg3[%c1, %c0_8, %c0_9] : memref<2x128x128xbf16, #tpu.memory_space<vmem>>, vector<1x128x128xbf16>
    %7 = vector.shape_cast %6 : vector<1x128x128xbf16> to vector<128x128xbf16>
    %c0_10 = arith.constant 0 : index
    %c0_11 = arith.constant 0 : index
    %8 = vector.load %arg4[%c0_10, %c0_11] : memref<2x128xf32, #tpu.memory_space<vmem>>, vector<2x128xf32>
    %9 = vector.extract_strided_slice %8 {offsets = [0, 0], sizes = [1, 128], strides = [1, 1]} : vector<2x128xf32> to vector<1x128xf32>
    %10 = vector.extract_strided_slice %8 {offsets = [1, 0], sizes = [1, 128], strides = [1, 1]} : vector<2x128xf32> to vector<1x128xf32>
    %cst = arith.constant dense<0.000000e+00> : vector<16x128xf32>
    %11 = tpu.matmul %1, %3, %cst {dimension_numbers = #tpu.dot_dimension_numbers<[1], [0], [0], [1], [0, 0, 1, 1], [], []>} : vector<16x16xbf16>, vector<16x128xbf16>, vector<16x128xf32> -> vector<16x128xf32>
    %12 = arith.truncf %11 : vector<16x128xf32> to vector<16x128xbf16>
    %cst_12 = arith.constant dense<0.000000e+00> : vector<16x128xf32>
    %13 = tpu.matmul %12, %5, %cst_12 {dimension_numbers = #tpu.dot_dimension_numbers<[1], [0], [0], [1], [0, 0, 1, 1], [], []>} : vector<16x128xbf16>, vector<128x128xbf16>, vector<16x128xf32> -> vector<16x128xf32>
    %14 = vector.broadcast %9 : vector<1x128xf32> to vector<16x128xf32>
    %15 = arith.addf %13, %14 : vector<16x128xf32>
    %cst_13 = arith.constant 0.000000e+00 : f32
    %16 = vector.broadcast %cst_13 : f32 to vector<16x128xf32>
    %17 = arith.maximumf %15, %16 : vector<16x128xf32>
    %18 = arith.truncf %17 : vector<16x128xf32> to vector<16x128xbf16>
    %cst_14 = arith.constant dense<0.000000e+00> : vector<16x128xf32>
    %19 = tpu.matmul %18, %7, %cst_14 {dimension_numbers = #tpu.dot_dimension_numbers<[1], [0], [0], [1], [0, 0, 1, 1], [], []>} : vector<16x128xbf16>, vector<128x128xbf16>, vector<16x128xf32> -> vector<16x128xf32>
    %20 = arith.truncf %19 : vector<16x128xf32> to vector<16x128xbf16>
    %cst_15 = arith.constant dense<0.000000e+00> : vector<16x128xf32>
    %21 = tpu.matmul %1, %20, %cst_15 {dimension_numbers = #tpu.dot_dimension_numbers<[1], [0], [0], [1], [0, 0, 1, 1], [], []>} : vector<16x16xbf16>, vector<16x128xbf16>, vector<16x128xf32> -> vector<16x128xf32>
    %22 = vector.broadcast %10 : vector<1x128xf32> to vector<16x128xf32>
    %23 = arith.addf %21, %22 : vector<16x128xf32>
    %c0_16 = arith.constant 0 : index
    %c0_17 = arith.constant 0 : index
    %c0_18 = arith.constant 0 : index
    %24 = vector.load %arg5[%c0_16, %c0_17, %c0_18] : memref<1x16x128xf32, #tpu.memory_space<vmem>>, vector<1x16x128xf32>
    %25 = vector.shape_cast %24 : vector<1x16x128xf32> to vector<16x128xf32>
    %26 = vector.shape_cast %23 : vector<16x128xf32> to vector<1x16x128xf32>
    tpu.vector_store %arg5[%c0_16, %c0_17, %c0_18], %26 {strides = array<i32>} : memref<1x16x128xf32, #tpu.memory_space<vmem>>, vector<1x16x128xf32>,
    return
  }
  func.func @transform_0(%arg0: i32) -> (i32, i32, i32) {
    %c0_i32 = arith.constant 0 : i32
    %c0_i32_0 = arith.constant 0 : i32
    %c0_i32_1 = arith.constant 0 : i32
    return %arg0, %c0_i32, %c0_i32_0 : i32, i32, i32
  }
  func.func @transform_1(%arg0: i32) -> (i32, i32, i32) {
    %c0_i32 = arith.constant 0 : i32
    %c0_i32_0 = arith.constant 0 : i32
    %c0_i32_1 = arith.constant 0 : i32
    return %arg0, %c0_i32, %c0_i32_0 : i32, i32, i32
  }
  func.func @transform_2(%arg0: i32) -> (i32, i32, i32) {
    %c0_i32 = arith.constant 0 : i32
    %c0_i32_0 = arith.constant 0 : i32
    %c0_i32_1 = arith.constant 0 : i32
    %c0_i32_2 = arith.constant 0 : i32
    return %c0_i32, %c0_i32_0, %c0_i32_1 : i32, i32, i32
  }
  func.func @transform_3(%arg0: i32) -> (i32, i32) {
    %c0_i32 = arith.constant 0 : i32
    %c0_i32_0 = arith.constant 0 : i32
    %c0_i32_1 = arith.constant 0 : i32
    return %c0_i32, %c0_i32_0 : i32, i32
  }
  func.func @transform_4(%arg0: i32) -> (i32, i32, i32) {
    %c0_i32 = arith.constant 0 : i32
    %c0_i32_0 = arith.constant 0 : i32
    %c0_i32_1 = arith.constant 0 : i32
    return %arg0, %c0_i32, %c0_i32_0 : i32, i32, i32
  }
}

</mosaic_0001>

<llo_original>
// kernel: _encode.1
$region0: #{_encode.1}
  #allocation0 [shape = 'u32[]', space=smem, size = 0x4, offset = 0x4, fixed_abs, tag = 'smem constant byte address 0x4 - core index']
  #allocation1 [shape = 'u32[144,128]{1,0:T(1,128)}', space=vmem, size = 0x12000, scoped, tag = 'internal scratch']
  %s0 = inlined_call_operand.vmem [shape: bf16[1,16,16], index: 0, kind: input, shape index: {}]
  %s1 = inlined_call_operand.vmem [shape: bf16[1,16,128], index: 1, kind: input, shape index: {}]
  %s2 = inlined_call_operand.hbm [shape: bf16[2,128,128], index: 2, kind: input, shape index: {}]
  %s3 = inlined_call_operand.vmem [shape: f32[2,128], index: 3, kind: input, shape index: {}]
  %s4 = inlined_call_operand.vmem [shape: f32[1,16,128], index: 4, kind: output, shape index: {}]
  %s5 = sld [smem:[#allocation0]]
  $region30: #{_encode.1} parent=0
    _
  %s7 = ssub.s32 1, %s5
  %s8 = scalar_select 0, %s7, %s5
  $region1: #{_encode.1} parent=0
    #allocation2 [shape = 'u8[65536]{0}', space=vmem, size = 0x10000, scoped, tag = 'input window, operand 2, single buffered']
    #allocation3 [shape = 's32[1]{0}', space=sflag, size = 0x4, scoped, tag = 'scoped memory for _encode.1']
    %9 = vsyncpa [#allocation3], 0
    // Predicated region
    $region2: #{_encode.1} parent=1 // pred_check
      _
    $region3: #{_encode.1} parent=1 // pred_check_branch
      %11 = sbr.rel (0) target = $region5
    $region4: #{_encode.1} parent=1 // pred_region
      _
    $region5: #{_encode.1} parent=1 // pred_fallthru
      _
    // Predicated region
    $region6: #{_encode.1} parent=1 // pred_check
      _
    $region7: #{_encode.1} parent=1 // pred_check_branch
      %13 = sbr.rel (0) target = $region9
    $region8: #{_encode.1} parent=1 // pred_region
      _
    $region9: #{_encode.1} parent=1 // pred_fallthru
      _
    // Predicated region
    $region10: #{_encode.1} parent=1 // pred_check
      _
    $region11: #{_encode.1} parent=1 // pred_check_branch
      %15 = sbr.rel (0) target = $region13
    $region12: #{_encode.1} parent=1 // pred_region
      %s17 = ssub.s32 2048, 2048
      %18 = vsyncadd [#allocation3], %s17
      %s19 = sshll.u32 [#allocation2], 4
      %s20 = int_to_ptr.vmem [resolvable:$true] %s19
      %25 = dma.hbm_to_vmem [thread:$0]  %s2, 2048, %s20, [#allocation3], 64, 64, 4
    $region13: #{_encode.1} parent=1 // pred_fallthru
      _
    // Predicated region
    $region14: #{_encode.1} parent=1 // pred_check
      _
    $region15: #{_encode.1} parent=1 // pred_check_branch
      %27 = sbr.rel (0) target = $region17
    $region16: #{_encode.1} parent=1 // pred_region
      _
    $region17: #{_encode.1} parent=1 // pred_fallthru
      _
    // Predicated region
    $region18: #{_encode.1} parent=1 // pred_check
      _
    $region19: #{_encode.1} parent=1 // pred_check_branch
      %29 = sbr.rel (0) target = $region21
    $region20: #{_encode.1} parent=1 // pred_region
      %30 = dma.done [#allocation3], 2048
    $region21: #{_encode.1} parent=1 // pred_fallthru
      _
    %v32 = vld [vmem:[%s0] sm:$0xf]
    %v33 = vld [vmem:[%s0 + $0x4] sm:$0xf]
    %v34 = vld [vmem:[%s1] sm:$0xf]
    %v35 = vld [vmem:[%s1 + $0x4] sm:$0xf]
    %v36 = vld [vmem:[#allocation2] sm:$0xf]
    %v37 = vld [vmem:[#allocation2 + $0x4] sm:$0xf]
    %v38 = vld [vmem:[#allocation2 + $0x8] sm:$0xf]
    %v39 = vld [vmem:[#allocation2 + $0xc] sm:$0xf]
    %v40 = vld [vmem:[#allocation2 + $0x10] sm:$0xf]
    %v41 = vld [vmem:[#allocation2 + $0x14] sm:$0xf]
    %v42 = vld [vmem:[#allocation2 + $0x18] sm:$0xf]
    %v43 = vld [vmem:[#allocation2 + $0x1c] sm:$0xf]
    %v44 = vld [vmem:[#allocation2 + $0x20] sm:$0xf]
    %v45 = vld [vmem:[#allocation2 + $0x24] sm:$0xf]
    %v46 = vld [vmem:[#allocation2 + $0x28] sm:$0xf]
    %v47 = vld [vmem:[#allocation2 + $0x2c] sm:$0xf]
    %v48 = vld [vmem:[#allocation2 + $0x30] sm:$0xf]
    %v49 = vld [vmem:[#allocation2 + $0x34] sm:$0xf]
    %v50 = vld [vmem:[#allocation2 + $0x38] sm:$0xf]
    %v51 = vld [vmem:[#allocation2 + $0x3c] sm:$0xf]
    %s52 = scalar_lea.vmem [#allocation2], 64
    %v53 = vld [vmem:[%s52] sm:$0xf]
    %v54 = vld [vmem:[%s52 + $0x4] sm:$0xf]
    %v55 = vld [vmem:[%s52 + $0x8] sm:$0xf]
    %v56 = vld [vmem:[%s52 + $0xc] sm:$0xf]
    %v57 = vld [vmem:[%s52 + $0x10] sm:$0xf]
    %v58 = vld [vmem:[%s52 + $0x14] sm:$0xf]
    %v59 = vld [vmem:[%s52 + $0x18] sm:$0xf]
    %v60 = vld [vmem:[%s52 + $0x1c] sm:$0xf]
    %v61 = vld [vmem:[%s52 + $0x20] sm:$0xf]
    %v62 = vld [vmem:[%s52 + $0x24] sm:$0xf]
    %v63 = vld [vmem:[%s52 + $0x28] sm:$0xf]
    %v64 = vld [vmem:[%s52 + $0x2c] sm:$0xf]
    %v65 = vld [vmem:[%s52 + $0x30] sm:$0xf]
    %v66 = vld [vmem:[%s52 + $0x34] sm:$0xf]
    %v67 = vld [vmem:[%s52 + $0x38] sm:$0xf]
    %v68 = vld [vmem:[%s52 + $0x3c] sm:$0xf]
    %v69 = vld [vmem:[%s3] sm:$0x3]
    %v72 = vunpack.c.l.b16 %v32
    %v73 = vunpack.c.l.b16 %v33
    %v74 = vpack.c.b16 %v73, %v72
    %v77 = vunpack.c.l.b16 %v34
    %v78 = vunpack.c.l.b16 %v35
    %v79 = vpack.c.b16 %v78, %v77
    %vm81 = vcmask 130048
    %v83 = vsel %vm81, %v74, 0
    %85 = vmatprep.subr.bf16.mxu0 0
    %86 = vmatpush1.bf16.msra.mxu0 0
    %87 = vmatprep.subr.bf16.mxu0 0
    %88 = vmatpush1.bf16.msra.mxu0 0
    %89 = vmatprep.subr.bf16.mxu0 0
    %90 = vmatpush1.bf16.msra.mxu0 0
    %91 = vmatprep.subr.bf16.mxu0 0
    %92 = vmatpush1.bf16.msra.mxu0 0
    %93 = vmatprep.subr.bf16.mxu0 0
    %94 = vmatpush1.bf16.msra.mxu0 0
    %95 = vmatprep.subr.bf16.mxu0 0
    %96 = vmatpush1.bf16.msra.mxu0 0
    %97 = vmatprep.subr.bf16.mxu0 0
    %98 = vmatpush1.bf16.msra.mxu0 0
    %99 = vmatprep.subr.bf16.mxu0 0
    %100 = vmatpush1.bf16.msra.mxu0 %v79
    %101 = vmatprep.subr.bf16.mxu0 0
    %102 = vmatpush2.bf16.msra.mxu0 0
    %103 = vmatprep.subr.bf16.mxu0 0
    %104 = vmatpush2.bf16.msra.mxu0 0
    %105 = vmatprep.subr.bf16.mxu0 0
    %106 = vmatpush2.bf16.msra.mxu0 0
    %107 = vmatprep.subr.bf16.mxu0 0
    %108 = vmatpush2.bf16.msra.mxu0 0
    %109 = vmatprep.subr.bf16.mxu0 0
    %110 = vmatpush2.bf16.msra.mxu0 0
    %111 = vmatprep.subr.bf16.mxu0 0
    %112 = vmatpush2.bf16.msra.mxu0 0
    %113 = vmatprep.subr.bf16.mxu0 0
    %114 = vmatpush2.bf16.msra.mxu0 0
    %115 = vmatprep.subr.bf16.mxu0 0
    %116 = vmatpush2.bf16.msra.mxu0 0
    %117 = vmatprep.mubr.bf16.mxu0 0
    %118 = vmatmul.mubr.bf16.gmra.mxu0 %v83
    %v119 = vpop.f32.mrf.mxu0
    %v120 = vadd.f32 0.0, %v119
    %v121 = vpop.f32.mrf.mxu0
    %v122 = vpop.f32.mrf.mxu0
    %v123 = vadd.f32 0.0, %v122
    %v124 = vpop.f32.mrf.mxu0
    %125 = vdwg.mxu0
    %v126 = vpack.c.bf16 %v123, %v120
    %v127 = vlaneseq
    %v128 = vshrl.u32 %v127, 7
    %v129 = vsub.s32 0, %v128
    %v130 = vrot.slane %v69, %v129
    %v147 = vunpack.c.l.b16 %v36
    %v148 = vunpack.c.l.b16 %v37
    %v149 = vunpack.c.l.b16 %v38
    %v150 = vunpack.c.l.b16 %v39
    %v151 = vunpack.c.l.b16 %v40
    %v152 = vunpack.c.l.b16 %v41
    %v153 = vunpack.c.l.b16 %v42
    %v154 = vunpack.c.l.b16 %v43
    %v155 = vunpack.c.l.b16 %v44
    %v156 = vunpack.c.l.b16 %v45
    %v157 = vunpack.c.l.b16 %v46
    %v158 = vunpack.c.l.b16 %v47
    %v159 = vunpack.c.l.b16 %v48
    %v160 = vunpack.c.l.b16 %v49
    %v161 = vunpack.c.l.b16 %v50
    %v162 = vunpack.c.l.b16 %v51
    %v163 = vpack.c.b16 %v148, %v147
    %v164 = vpack.c.b16 %v150, %v149
    %v165 = vpack.c.b16 %v152, %v151
    %v166 = vpack.c.b16 %v154, %v153
    %v167 = vpack.c.b16 %v156, %v155
    %v168 = vpack.c.b16 %v158, %v157
    %v169 = vpack.c.b16 %v160, %v159
    %v170 = vpack.c.b16 %v162, %v161
    %179 = vmatprep.subr.bf16.mxu0 0
    %180 = vmatpush1.bf16.msra.mxu0 %v170
    %181 = vmatprep.subr.bf16.mxu0 0
    %182 = vmatpush1.bf16.msra.mxu0 %v169
    %183 = vmatprep.subr.bf16.mxu0 0
    %184 = vmatpush1.bf16.msra.mxu0 %v168
    %185 = vmatprep.subr.bf16.mxu0 0
    %186 = vmatpush1.bf16.msra.mxu0 %v167
    %187 = vmatprep.subr.bf16.mxu0 0
    %188 = vmatpush1.bf16.msra.mxu0 %v166
    %189 = vmatprep.subr.bf16.mxu0 0
    %190 = vmatpush1.bf16.msra.mxu0 %v165
    %191 = vmatprep.subr.bf16.mxu0 0
    %192 = vmatpush1.bf16.msra.mxu0 %v164
    %193 = vmatprep.subr.bf16.mxu0 0
    %194 = vmatpush1.bf16.msra.mxu0 %v163
    %195 = vmatprep.subr.bf16.mxu0 0
    %196 = vmatpush2.bf16.msra.mxu0 0
    %197 = vmatprep.subr.bf16.mxu0 0
    %198 = vmatpush2.bf16.msra.mxu0 0
    %199 = vmatprep.subr.bf16.mxu0 0
    %200 = vmatpush2.bf16.msra.mxu0 0
    %201 = vmatprep.subr.bf16.mxu0 0
    %202 = vmatpush2.bf16.msra.mxu0 0
    %203 = vmatprep.subr.bf16.mxu0 0
    %204 = vmatpush2.bf16.msra.mxu0 0
    %205 = vmatprep.subr.bf16.mxu0 0
    %206 = vmatpush2.bf16.msra.mxu0 0
    %207 = vmatprep.subr.bf16.mxu0 0
    %208 = vmatpush2.bf16.msra.mxu0 0
    %209 = vmatprep.subr.bf16.mxu0 0
    %210 = vmatpush2.bf16.msra.mxu0 0
    %211 = vmatprep.mubr.bf16.mxu0 0
    %212 = vmatmul.mubr.bf16.gmra.mxu0 %v126
    %v213 = vpop.f32.mrf.mxu0
    %v214 = vadd.f32 %v130, %v213
    %v215 = vpop.f32.mrf.mxu0
    %v216 = vpop.f32.mrf.mxu0
    %v217 = vadd.f32 %v130, %v216
    %v218 = vpop.f32.mrf.mxu0
    %219 = vdwg.mxu0
    %v220 = vmax.f32 %v214, 0.0
    %v221 = vmax.f32 %v217, 0.0
    %v222 = vpack.c.bf16 %v221, %v220
    %v239 = vunpack.c.l.b16 %v53
    %v240 = vunpack.c.l.b16 %v54
    %v241 = vunpack.c.l.b16 %v55
    %v242 = vunpack.c.l.b16 %v56
    %v243 = vunpack.c.l.b16 %v57
    %v244 = vunpack.c.l.b16 %v58
    %v245 = vunpack.c.l.b16 %v59
    %v246 = vunpack.c.l.b16 %v60
    %v247 = vunpack.c.l.b16 %v61
    %v248 = vunpack.c.l.b16 %v62
    %v249 = vunpack.c.l.b16 %v63
    %v250 = vunpack.c.l.b16 %v64
    %v251 = vunpack.c.l.b16 %v65
    %v252 = vunpack.c.l.b16 %v66
    %v253 = vunpack.c.l.b16 %v67
    %v254 = vunpack.c.l.b16 %v68
    %v255 = vpack.c.b16 %v240, %v239
    %v256 = vpack.c.b16 %v242, %v241
    %v257 = vpack.c.b16 %v244, %v243
    %v258 = vpack.c.b16 %v246, %v245
    %v259 = vpack.c.b16 %v248, %v247
    %v260 = vpack.c.b16 %v250, %v249
    %v261 = vpack.c.b16 %v252, %v251
    %v262 = vpack.c.b16 %v254, %v253
    %271 = vmatprep.subr.bf16.mxu0 0
    %272 = vmatpush1.bf16.msra.mxu0 %v262
    %273 = vmatprep.subr.bf16.mxu0 0
    %274 = vmatpush1.bf16.msra.mxu0 %v261
    %275 = vmatprep.subr.bf16.mxu0 0
    %276 = vmatpush1.bf16.msra.mxu0 %v260
    %277 = vmatprep.subr.bf16.mxu0 0
    %278 = vmatpush1.bf16.msra.mxu0 %v259
    %279 = vmatprep.subr.bf16.mxu0 0
    %280 = vmatpush1.bf16.msra.mxu0 %v258
    %281 = vmatprep.subr.bf16.mxu0 0
    %282 = vmatpush1.bf16.msra.mxu0 %v257
    %283 = vmatprep.subr.bf16.mxu0 0
    %284 = vmatpush1.bf16.msra.mxu0 %v256
    %285 = vmatprep.subr.bf16.mxu0 0
    %286 = vmatpush1.bf16.msra.mxu0 %v255
    %287 = vmatprep.subr.bf16.mxu0 0
    %288 = vmatpush2.bf16.msra.mxu0 0
    %289 = vmatprep.subr.bf16.mxu0 0
    %290 = vmatpush2.bf16.msra.mxu0 0
    %291 = vmatprep.subr.bf16.mxu0 0
    %292 = vmatpush2.bf16.msra.mxu0 0
    %293 = vmatprep.subr.bf16.mxu0 0
    %294 = vmatpush2.bf16.msra.mxu0 0
    %295 = vmatprep.subr.bf16.mxu0 0
    %296 = vmatpush2.bf16.msra.mxu0 0
    %297 = vmatprep.subr.bf16.mxu0 0
    %298 = vmatpush2.bf16.msra.mxu0 0
    %299 = vmatprep.subr.bf16.mxu0 0
    %300 = vmatpush2.bf16.msra.mxu0 0
    %301 = vmatprep.subr.bf16.mxu0 0
    %302 = vmatpush2.bf16.msra.mxu0 0
    %303 = vmatprep.mubr.bf16.mxu0 0
    %304 = vmatmul.mubr.bf16.gmra.mxu0 %v222
    %v305 = vpop.f32.mrf.mxu0
    %v306 = vadd.f32 0.0, %v305
    %v307 = vpop.f32.mrf.mxu0
    %v308 = vpop.f32.mrf.mxu0
    %v309 = vadd.f32 0.0, %v308
    %v310 = vpop.f32.mrf.mxu0
    %311 = vdwg.mxu0
    %v312 = vpack.c.bf16 %v309, %v306
    %v313 = vlaneseq
    %v314 = vshrl.u32 %v313, 7
    %v315 = vsub.s32 1, %v314
    %v316 = vrot.slane %v69, %v315
    %317 = vmatprep.subr.bf16.mxu0 0
    %318 = vmatpush1.bf16.msra.mxu0 0
    %319 = vmatprep.subr.bf16.mxu0 0
    %320 = vmatpush1.bf16.msra.mxu0 0
    %321 = vmatprep.subr.bf16.mxu0 0
    %322 = vmatpush1.bf16.msra.mxu0 0
    %323 = vmatprep.subr.bf16.mxu0 0
    %324 = vmatpush1.bf16.msra.mxu0 0
    %325 = vmatprep.subr.bf16.mxu0 0
    %326 = vmatpush1.bf16.msra.mxu0 0
    %327 = vmatprep.subr.bf16.mxu0 0
    %328 = vmatpush1.bf16.msra.mxu0 0
    %329 = vmatprep.subr.bf16.mxu0 0
    %330 = vmatpush1.bf16.msra.mxu0 0
    %331 = vmatprep.subr.bf16.mxu0 0
    %332 = vmatpush1.bf16.msra.mxu0 %v312
    %333 = vmatprep.subr.bf16.mxu0 0
    %334 = vmatpush2.bf16.msra.mxu0 0
    %335 = vmatprep.subr.bf16.mxu0 0
    %336 = vmatpush2.bf16.msra.mxu0 0
    %337 = vmatprep.subr.bf16.mxu0 0
    %338 = vmatpush2.bf16.msra.mxu0 0
    %339 = vmatprep.subr.bf16.mxu0 0
    %340 = vmatpush2.bf16.msra.mxu0 0
    %341 = vmatprep.subr.bf16.mxu0 0
    %342 = vmatpush2.bf16.msra.mxu0 0
    %343 = vmatprep.subr.bf16.mxu0 0
    %344 = vmatpush2.bf16.msra.mxu0 0
    %345 = vmatprep.subr.bf16.mxu0 0
    %346 = vmatpush2.bf16.msra.mxu0 0
    %347 = vmatprep.subr.bf16.mxu0 0
    %348 = vmatpush2.bf16.msra.mxu0 0
    %349 = vmatprep.mubr.bf16.mxu0 0
    %350 = vmatmul.mubr.bf16.gmra.mxu0 %v83
    %v351 = vpop.f32.mrf.mxu0
    %v352 = vadd.f32 %v316, %v351
    %v353 = vpop.f32.mrf.mxu0
    %v354 = vpop.f32.mrf.mxu0
    %v355 = vadd.f32 %v316, %v354
    %v356 = vpop.f32.mrf.mxu0
    %357 = vdwg.mxu0
    %358 = vst [vmem:[%s4] sm:$0xff] %v352
    %359 = vst [vmem:[%s4 + $0x8] sm:$0xff] %v355
    // Predicated region
    $region22: #{_encode.1} parent=1 // pred_check
      _
    $region23: #{_encode.1} parent=1 // pred_check_branch
      %361 = sbr.rel (0) target = $region25
    $region24: #{_encode.1} parent=1 // pred_region
      _
    $region25: #{_encode.1} parent=1 // pred_fallthru
      _
    // Predicated region
    $region26: #{_encode.1} parent=1 // pred_check
      _
    $region27: #{_encode.1} parent=1 // pred_check_branch
      %363 = sbr.rel (0) target = $region29
    $region28: #{_encode.1} parent=1 // pred_region
      _
    $region29: #{_encode.1} parent=1 // pred_fallthru
      _
    %364 = vsyncpa [#allocation3], 1

</llo_original>
